<compile_context>
chip_gen: v7x
topology: tpu7x:2x2x1
jax: 0.10.0
libtpu: 0.0.40
codegen_flags: <defaults>
</compile_context>

<pallas_src>
import functools

import jax
import jax.numpy as jnp
from jax.experimental import pallas as pl
from jax.experimental.pallas import tpu as pltpu


def _se_conv_bn_kernel(x_ref, gate_ref, w_ref, gb_ref, out_ref, *, matmul_dtype):
    # x_ref:    [Cin,  HW ]  (free N=1 NCHW reshape; lane axis = spatial)
    # gate_ref: [1,    Cin]  (pre-sigmoid SE gate)
    # w_ref:    [Cout, Cin]  (1x1 conv weight)
    # gb_ref:   [Cout, 2  ]  (col 0 = BN gamma, col 1 = BN beta)
    # out_ref:  [Cout, HW ]
    hw = x_ref.shape[1]

    # Fold sigmoid(gate) into the weight: lane-aligned broadcast over Cin (EUP+VPU).
    gate = jax.nn.sigmoid(gate_ref[...].astype(jnp.float32))        # [1, Cin]
    w_scaled = w_ref[...].astype(jnp.float32) * gate                # [Cout, Cin]

    # 1x1 conv as a single MXU matmul, f32 accumulation.  `matmul_dtype=bf16`
    # (in-kernel cast only; the HBM/VMEM copies stay in the caller's dtype)
    # avoids the f32 MXU emulation passes — worth it on v5e if tolerance allows.
    mm_dtype = matmul_dtype if matmul_dtype is not None else x_ref.dtype
    y = jnp.dot(
        w_scaled.astype(mm_dtype),
        x_ref[...].astype(mm_dtype),
        preferred_element_type=jnp.float32,
    )                                                               # [Cout, HW] f32

    # BatchNorm2d (training): per-channel mean / biased variance over N*H*W
    # (N=1 -> just HW).  Both reductions are issued back-to-back so Mosaic
    # schedules them in the same traversal window; they run on the XLU slot.
    inv_hw = 1.0 / hw
    s = jnp.sum(y, axis=1, keepdims=True)                           # [Cout, 1]
    sq = jnp.sum(y * y, axis=1, keepdims=True)                      # [Cout, 1]
    mean = s * inv_hw
    var = sq * inv_hw - mean * mean                                 # biased variance

    gb = gb_ref[...].astype(jnp.float32)                            # [Cout, 2]
    gamma = gb[:, 0:1]                                              # [Cout, 1]
    beta = gb[:, 1:2]                                               # [Cout, 1]
    scale = jax.lax.rsqrt(var + 1e-5) * gamma                       # [Cout, 1]
    shift = beta - mean * scale                                     # [Cout, 1]

    # Single normalize pass over y.
    out_ref[...] = (y * scale + shift).astype(out_ref.dtype)


def se_conv_bn(x_nchw, gate_nchw, conv_w, gamma, beta, *, matmul_dtype=None):
    """Fused sigmoid(gate)*x -> 1x1 conv -> BatchNorm2d (batch stats).

    x_nchw: [1, Cin, H, W], gate_nchw: [1, Cin, 1, 1], conv_w: [Cout, Cin, 1, 1],
    gamma/beta: [Cout].  Pass bf16 tensors directly if the model runs bf16 (no
    wrapper cast is inserted).  `matmul_dtype=jnp.bfloat16` casts the matmul
    operands in-kernel (f32 accumulate) — recommended on v5e if tolerance allows.
    """
    n, cin, h, w = x_nchw.shape
    cout = conv_w.shape[0]
    assert n == 1, "kernel written for N=1 (as in the reference module)"
    hw = h * w

    # All of these are free reshapes (no transpose, no HBM round trip).
    x_mat = x_nchw.reshape(cin, hw)             # [Cin, HW]
    gate_mat = gate_nchw.reshape(1, cin)        # [1, Cin]
    w_mat = conv_w.reshape(cout, cin)           # [Cout, Cin]
    # Pack BN affine params into one [Cout, 2] argument (one DMA instead of two,
    # one padded VMEM tile instead of two).  In a real model this would be packed
    # once at parameter-load time; here it is a ~1 KB stack, negligible.
    gb = jnp.stack([gamma, beta], axis=1)       # [Cout, 2]

    itemsize = jnp.dtype(x_nchw.dtype).itemsize
    bytes_accessed = (
        itemsize * (cin * hw + cin + cout * cin + cout * hw) + 4 * 2 * cout
    )
    cost = pl.CostEstimate(
        flops=2 * cout * cin * hw + 8 * cout * hw,   # matmul + BN epilogue
        transcendentals=cin + cout,                  # sigmoid(Cin) + rsqrt(Cout)
        bytes_accessed=bytes_accessed,
    )

    kernel = functools.partial(_se_conv_bn_kernel, matmul_dtype=matmul_dtype)

    out_mat = pl.pallas_call(
        kernel,
        out_shape=jax.ShapeDtypeStruct((cout, hw), x_nchw.dtype),
        in_specs=[
            pl.BlockSpec(memory_space=pltpu.VMEM),  # x        [Cin, HW]
            pl.BlockSpec(memory_space=pltpu.VMEM),  # gate     [1, Cin]
            pl.BlockSpec(memory_space=pltpu.VMEM),  # weight   [Cout, Cin]
            pl.BlockSpec(memory_space=pltpu.VMEM),  # gamma/beta [Cout, 2]
        ],
        out_specs=pl.BlockSpec(memory_space=pltpu.VMEM),
        cost_estimate=cost,
    )(x_mat, gate_mat, w_mat, gb)

    # [Cout, HW] -> [1, Cout, H, W] is again a free reshape.
    return out_mat.reshape(1, cout, h, w)


def _reference(x_nchw, gate_nchw, conv_w, gamma, beta):
    """Pure-JAX reference of the PyTorch forward (training-mode BN)."""
    n, cin, h, w = x_nchw.shape
    cout = conv_w.shape[0]
    xg = x_nchw.astype(jnp.float32) * jax.nn.sigmoid(gate_nchw.astype(jnp.float32))
    x_mat = xg.reshape(cin, h * w)
    y = jnp.dot(conv_w.reshape(cout, cin).astype(jnp.float32), x_mat,
                preferred_element_type=jnp.float32)                  # [Cout, HW]
    mean = jnp.mean(y, axis=1, keepdims=True)
    var = jnp.mean((y - mean) ** 2, axis=1, keepdims=True)           # biased
    yn = (y - mean) * jax.lax.rsqrt(var + 1e-5)
    yn = yn * gamma.reshape(cout, 1) + beta.reshape(cout, 1)
    return yn.reshape(1, cout, h, w).astype(x_nchw.dtype)


if __name__ == "__main__":
    key = jax.random.PRNGKey(0)
    k_x, k_gate, k_w = jax.random.split(key, 3)

    # Shapes taken directly from the module (already small).
    N, CIN, H, W = 1, 384, 14, 14
    COUT = 128

    x195 = jax.random.normal(k_x, (N, CIN, H, W), dtype=jnp.float32)
    x199 = jax.random.normal(k_gate, (N, CIN, 1, 1), dtype=jnp.float32)

    # Deterministic parameter init (Conv2d weight ~ kaiming-ish scale; BN defaults).
    fan_in = CIN * 1 * 1
    conv_w = jax.random.normal(k_w, (COUT, CIN, 1, 1), dtype=jnp.float32) * (
        1.0 / jnp.sqrt(fan_in)
    )
    gamma = jnp.ones((COUT,), dtype=jnp.float32)   # BatchNorm weight default
    beta = jnp.zeros((COUT,), dtype=jnp.float32)   # BatchNorm bias default

    ref = jax.block_until_ready(_reference(x195, x199, conv_w, gamma, beta))

    # Default path: native-precision matmul (exact-ish vs f32 reference).
    out = jax.block_until_ready(se_conv_bn(x195, x199, conv_w, gamma, beta))
    assert out.shape == (N, COUT, H, W), out.shape
    assert jnp.allclose(out, ref, rtol=1e-3, atol=1e-3), (
        float(jnp.max(jnp.abs(out - ref)))
    )

    # v5e-oriented path: in-kernel bf16 matmul operands (f32 accumulate).
    # Looser tolerance reflects bf16 operand rounding of the normalized output.
    out_bf16mm = jax.block_until_ready(
        se_conv_bn(x195, x199, conv_w, gamma, beta, matmul_dtype=jnp.bfloat16)
    )
    assert jnp.allclose(out_bf16mm, ref, rtol=2e-2, atol=2e-2), (
        float(jnp.max(jnp.abs(out_bf16mm - ref)))
    )

    print("KERNEL_OK")
</pallas_src>

<mosaic_0001>
module attributes {stable_mosaic.version = 11 : i64} {
  func.func @_se_conv_bn_kernel(%arg0: memref<384x196xf32, #tpu.memory_space<vmem>>, %arg1: memref<1x384xf32, #tpu.memory_space<vmem>>, %arg2: memref<128x384xf32, #tpu.memory_space<vmem>>, %arg3: memref<128x2xf32, #tpu.memory_space<vmem>>, %arg4: memref<128x196xf32, #tpu.memory_space<vmem>>) attributes {dimension_semantics = [], scalar_prefetch = 0 : i64, scratch_operands = 0 : i64, tpu.core_type = #tpu.core_type<tc>} {
    %c0 = arith.constant 0 : index
    %c0_0 = arith.constant 0 : index
    %0 = vector.load %arg1[%c0, %c0_0] : memref<1x384xf32, #tpu.memory_space<vmem>>, vector<1x384xf32>
    %1 = arith.negf %0 : vector<1x384xf32>
    %2 = math.exp %1 : vector<1x384xf32>
    %cst = arith.constant 1.000000e+00 : f32
    %3 = vector.broadcast %cst : f32 to vector<1x384xf32>
    %4 = arith.addf %3, %2 : vector<1x384xf32>
    %5 = arith.divf %3, %4 : vector<1x384xf32>
    %c0_1 = arith.constant 0 : index
    %c0_2 = arith.constant 0 : index
    %6 = vector.load %arg2[%c0_1, %c0_2] : memref<128x384xf32, #tpu.memory_space<vmem>>, vector<128x384xf32>
    %7 = vector.broadcast %5 : vector<1x384xf32> to vector<128x384xf32>
    %8 = arith.mulf %6, %7 : vector<128x384xf32>
    %c0_3 = arith.constant 0 : index
    %c0_4 = arith.constant 0 : index
    %9 = vector.load %arg0[%c0_3, %c0_4] : memref<384x196xf32, #tpu.memory_space<vmem>>, vector<384x196xf32>
    %cst_5 = arith.constant dense<0.000000e+00> : vector<128x196xf32>
    %10 = tpu.matmul %8, %9, %cst_5 {dimension_numbers = #tpu.dot_dimension_numbers<[1], [0], [0], [1], [0, 0, 1, 1], [], []>} : vector<128x384xf32>, vector<384x196xf32>, vector<128x196xf32> -> vector<128x196xf32>
    %cst_6 = arith.constant dense<0.000000e+00> : vector<128xf32>
    %11 = vector.multi_reduction <add>, %10, %cst_6 [1] : vector<128x196xf32> to vector<128xf32>
    %12 = vector.shape_cast %11 : vector<128xf32> to vector<128x1xf32>
    %13 = arith.mulf %10, %10 : vector<128x196xf32>
    %cst_7 = arith.constant dense<0.000000e+00> : vector<128xf32>
    %14 = vector.multi_reduction <add>, %13, %cst_7 [1] : vector<128x196xf32> to vector<128xf32>
    %15 = vector.shape_cast %14 : vector<128xf32> to vector<128x1xf32>
    %cst_8 = arith.constant 0.00510204071 : f32
    %16 = vector.broadcast %cst_8 : f32 to vector<128x1xf32>
    %17 = arith.mulf %12, %16 : vector<128x1xf32>
    %cst_9 = arith.constant 0.00510204071 : f32
    %18 = vector.broadcast %cst_9 : f32 to vector<128x1xf32>
    %19 = arith.mulf %15, %18 : vector<128x1xf32>
    %20 = arith.mulf %17, %17 : vector<128x1xf32>
    %21 = arith.subf %19, %20 : vector<128x1xf32>
    %c0_10 = arith.constant 0 : index
    %c0_11 = arith.constant 0 : index
    %22 = vector.load %arg3[%c0_10, %c0_11] : memref<128x2xf32, #tpu.memory_space<vmem>>, vector<128x2xf32>
    %23 = vector.extract_strided_slice %22 {offsets = [0, 0], sizes = [128, 1], strides = [1, 1]} : vector<128x2xf32> to vector<128x1xf32>
    %24 = vector.extract_strided_slice %22 {offsets = [0, 1], sizes = [128, 1], strides = [1, 1]} : vector<128x2xf32> to vector<128x1xf32>
    %cst_12 = arith.constant 9.99999974E-6 : f32
    %25 = vector.broadcast %cst_12 : f32 to vector<128x1xf32>
    %26 = arith.addf %21, %25 : vector<128x1xf32>
    %27 = math.rsqrt %26 : vector<128x1xf32>
    %28 = arith.mulf %27, %23 : vector<128x1xf32>
    %29 = arith.mulf %17, %28 : vector<128x1xf32>
    %30 = arith.subf %24, %29 : vector<128x1xf32>
    %31 = vector.broadcast %28 : vector<128x1xf32> to vector<128x196xf32>
    %32 = arith.mulf %10, %31 : vector<128x196xf32>
    %33 = vector.broadcast %30 : vector<128x1xf32> to vector<128x196xf32>
    %34 = arith.addf %32, %33 : vector<128x196xf32>
    %c0_13 = arith.constant 0 : index
    %c0_14 = arith.constant 0 : index
    %35 = vector.load %arg4[%c0_13, %c0_14] : memref<128x196xf32, #tpu.memory_space<vmem>>, vector<128x196xf32>
    tpu.vector_store %arg4[%c0_13, %c0_14], %34 {strides = array<i32>} : memref<128x196xf32, #tpu.memory_space<vmem>>, vector<128x196xf32>,
    return
  }
}

</mosaic_0001>

<llo_original>
// kernel: tpu_custom_call.1
$region0: #{tpu_custom_call.1}
  #allocation0 [shape = 'u32[]', space=smem, size = 0x4, offset = 0x4, fixed_abs, tag = 'smem constant byte address 0x4 - core index']
  #allocation1 [shape = 'u32[144,128]{1,0:T(1,128)}', space=vmem, size = 0x12000, scoped, tag = 'internal scratch']
  %s0 = inlined_call_operand.vmem [shape: f32[384,196], index: 0, kind: input, shape index: {}]
  %s1 = inlined_call_operand.vmem [shape: f32[1,384], index: 1, kind: input, shape index: {}]
  %s2 = inlined_call_operand.vmem [shape: f32[128,384], index: 2, kind: input, shape index: {}]
  %s3 = inlined_call_operand.vmem [shape: f32[128,2], index: 3, kind: input, shape index: {}]
  %s4 = inlined_call_operand.vmem [shape: f32[128,196], index: 4, kind: output, shape index: {}]
  %s5 = sld [smem:[#allocation0]]
  $region26: #{tpu_custom_call.1} parent=0
    _
  %s7 = ssub.s32 1, %s5
  %s8 = scalar_select 0, %s7, %s5
  // Predicated region
  $region2: #{tpu_custom_call.1} parent=0 // pred_check
    _
  $region3: #{tpu_custom_call.1} parent=0 // pred_check_branch
    %10 = sbr.rel (0) target = $region5
  $region4: #{tpu_custom_call.1} parent=0 // pred_region
    _
  $region5: #{tpu_custom_call.1} parent=0 // pred_fallthru
    _
  // Predicated region
  $region6: #{tpu_custom_call.1} parent=0 // pred_check
    _
  $region7: #{tpu_custom_call.1} parent=0 // pred_check_branch
    %12 = sbr.rel (0) target = $region9
  $region8: #{tpu_custom_call.1} parent=0 // pred_region
    _
  $region9: #{tpu_custom_call.1} parent=0 // pred_fallthru
    _
  // Predicated region
  $region10: #{tpu_custom_call.1} parent=0 // pred_check
    _
  $region11: #{tpu_custom_call.1} parent=0 // pred_check_branch
    %14 = sbr.rel (0) target = $region13
  $region12: #{tpu_custom_call.1} parent=0 // pred_region
    _
  $region13: #{tpu_custom_call.1} parent=0 // pred_fallthru
    _
  // Predicated region
  $region14: #{tpu_custom_call.1} parent=0 // pred_check
    _
  $region15: #{tpu_custom_call.1} parent=0 // pred_check_branch
    %16 = sbr.rel (0) target = $region17
  $region16: #{tpu_custom_call.1} parent=0 // pred_region
    _
  $region17: #{tpu_custom_call.1} parent=0 // pred_fallthru
    _
  %v17 = vld [vmem:[%s1] sm:$0x7]
  %v18 = vxor.u32 %v17, 2147483648
  %v19 = vmul.f32 %v18, 1.442695
  %v20 = vpow.pop %v19
  %v21 = vadd.f32 %v20, 1.0
  %v22 = vrcp.pop %v21
  %v23 = vmul.f32 1.0, %v22
  %v24 = vld [vmem:[%s2] sm:$0xff]
  %v25 = vld [vmem:[%s2 + $0x8] sm:$0xff]
  %v26 = vld [vmem:[%s2 + $0x10] sm:$0xff]
  %v27 = vld [vmem:[%s2 + $0x18] sm:$0xff]
  %v28 = vld [vmem:[%s2 + $0x20] sm:$0xff]
  %v29 = vld [vmem:[%s2 + $0x28] sm:$0xff]
  %v30 = vld [vmem:[%s2 + $0x30] sm:$0xff]
  %v31 = vld [vmem:[%s2 + $0x38] sm:$0xff]
  %v32 = vld [vmem:[%s2 + $0x40] sm:$0xff]
  %v33 = vld [vmem:[%s2 + $0x48] sm:$0xff]
  %v34 = vld [vmem:[%s2 + $0x50] sm:$0xff]
  %v35 = vld [vmem:[%s2 + $0x58] sm:$0xff]
  %v36 = vld [vmem:[%s2 + $0x60] sm:$0xff]
  %v37 = vld [vmem:[%s2 + $0x68] sm:$0xff]
  %v38 = vld [vmem:[%s2 + $0x70] sm:$0xff]
  %v39 = vld [vmem:[%s2 + $0x78] sm:$0xff]
  %v40 = vld [vmem:[%s2 + $0x80] sm:$0xff]
  %v41 = vld [vmem:[%s2 + $0x88] sm:$0xff]
  %v42 = vld [vmem:[%s2 + $0x90] sm:$0xff]
  %v43 = vld [vmem:[%s2 + $0x98] sm:$0xff]
  %v44 = vld [vmem:[%s2 + $0xa0] sm:$0xff]
  %v45 = vld [vmem:[%s2 + $0xa8] sm:$0xff]
  %v46 = vld [vmem:[%s2 + $0xb0] sm:$0xff]
  %v47 = vld [vmem:[%s2 + $0xb8] sm:$0xff]
  %v48 = vld [vmem:[%s2 + $0xc0] sm:$0xff]
  %v49 = vld [vmem:[%s2 + $0xc8] sm:$0xff]
  %v50 = vld [vmem:[%s2 + $0xd0] sm:$0xff]
  %v51 = vld [vmem:[%s2 + $0xd8] sm:$0xff]
  %v52 = vld [vmem:[%s2 + $0xe0] sm:$0xff]
  %v53 = vld [vmem:[%s2 + $0xe8] sm:$0xff]
  %v54 = vld [vmem:[%s2 + $0xf0] sm:$0xff]
  %v55 = vld [vmem:[%s2 + $0xf8] sm:$0xff]
  %v56 = vld [vmem:[%s2 + $0x100] sm:$0xff]
  %v57 = vld [vmem:[%s2 + $0x108] sm:$0xff]
  %v58 = vld [vmem:[%s2 + $0x110] sm:$0xff]
  %v59 = vld [vmem:[%s2 + $0x118] sm:$0xff]
  %v60 = vld [vmem:[%s2 + $0x120] sm:$0xff]
  %v61 = vld [vmem:[%s2 + $0x128] sm:$0xff]
  %v62 = vld [vmem:[%s2 + $0x130] sm:$0xff]
  %v63 = vld [vmem:[%s2 + $0x138] sm:$0xff]
  %v64 = vld [vmem:[%s2 + $0x140] sm:$0xff]
  %v65 = vld [vmem:[%s2 + $0x148] sm:$0xff]
  %v66 = vld [vmem:[%s2 + $0x150] sm:$0xff]
  %v67 = vld [vmem:[%s2 + $0x158] sm:$0xff]
  %v68 = vld [vmem:[%s2 + $0x160] sm:$0xff]
  %v69 = vld [vmem:[%s2 + $0x168] sm:$0xff]
  %v70 = vld [vmem:[%s2 + $0x170] sm:$0xff]
  %v71 = vld [vmem:[%s2 + $0x178] sm:$0xff]
  %v73 = vlaneseq
  %v74 = vshrl.u32 %v73, 7
  %v75 = vsub.s32 0, %v74
  %v76 = vrot.slane %v23, %v75
  %v77 = vlaneseq
  %v78 = vshrl.u32 %v77, 7
  %v79 = vsub.s32 1, %v78
  %v80 = vrot.slane %v23, %v79
  %v81 = vlaneseq
  %v82 = vshrl.u32 %v81, 7
  %v83 = vsub.s32 2, %v82
  %v84 = vrot.slane %v23, %v83
  %v88 = vmul.f32 %v24, %v76
  %v89 = vmul.f32 %v25, %v80
  %v90 = vmul.f32 %v26, %v84
  %v91 = vmul.f32 %v27, %v76
  %v92 = vmul.f32 %v28, %v80
  %v93 = vmul.f32 %v29, %v84
  %v94 = vmul.f32 %v30, %v76
  %v95 = vmul.f32 %v31, %v80
  %v96 = vmul.f32 %v32, %v84
  %v97 = vmul.f32 %v33, %v76
  %v98 = vmul.f32 %v34, %v80
  %v99 = vmul.f32 %v35, %v84
  %v100 = vmul.f32 %v36, %v76
  %v101 = vmul.f32 %v37, %v80
  %v102 = vmul.f32 %v38, %v84
  %v103 = vmul.f32 %v39, %v76
  %v104 = vmul.f32 %v40, %v80
  %v105 = vmul.f32 %v41, %v84
  %v106 = vmul.f32 %v42, %v76
  %v107 = vmul.f32 %v43, %v80
  %v108 = vmul.f32 %v44, %v84
  %v109 = vmul.f32 %v45, %v76
  %v110 = vmul.f32 %v46, %v80
  %v111 = vmul.f32 %v47, %v84
  %v112 = vmul.f32 %v48, %v76
  %v113 = vmul.f32 %v49, %v80
  %v114 = vmul.f32 %v50, %v84
  %v115 = vmul.f32 %v51, %v76
  %v116 = vmul.f32 %v52, %v80
  %v117 = vmul.f32 %v53, %v84
  %v118 = vmul.f32 %v54, %v76
  %v119 = vmul.f32 %v55, %v80
  %v120 = vmul.f32 %v56, %v84
  %v121 = vmul.f32 %v57, %v76
  %v122 = vmul.f32 %v58, %v80
  %v123 = vmul.f32 %v59, %v84
  %v124 = vmul.f32 %v60, %v76
  %v125 = vmul.f32 %v61, %v80
  %v126 = vmul.f32 %v62, %v84
  %v127 = vmul.f32 %v63, %v76
  %v128 = vmul.f32 %v64, %v80
  %v129 = vmul.f32 %v65, %v84
  %v130 = vmul.f32 %v66, %v76
  %v131 = vmul.f32 %v67, %v80
  %v132 = vmul.f32 %v68, %v84
  %v133 = vmul.f32 %v69, %v76
  %v134 = vmul.f32 %v70, %v80
  %v135 = vmul.f32 %v71, %v84
  %v136 = vld [vmem:[%s0] sm:$0xff]
  %v137 = vld [vmem:[%s0 + $0x8] sm:$0xff]
  %v138 = vld [vmem:[%s0 + $0x10] sm:$0xff]
  %v139 = vld [vmem:[%s0 + $0x18] sm:$0xff]
  %v140 = vld [vmem:[%s0 + $0x20] sm:$0xff]
  %v141 = vld [vmem:[%s0 + $0x28] sm:$0xff]
  %v142 = vld [vmem:[%s0 + $0x30] sm:$0xff]
  %v143 = vld [vmem:[%s0 + $0x38] sm:$0xff]
  %v144 = vld [vmem:[%s0 + $0x40] sm:$0xff]
  %v145 = vld [vmem:[%s0 + $0x48] sm:$0xff]
  %v146 = vld [vmem:[%s0 + $0x50] sm:$0xff]
  %v147 = vld [vmem:[%s0 + $0x58] sm:$0xff]
  %v148 = vld [vmem:[%s0 + $0x60] sm:$0xff]
  %v149 = vld [vmem:[%s0 + $0x68] sm:$0xff]
  %v150 = vld [vmem:[%s0 + $0x70] sm:$0xff]
  %v151 = vld [vmem:[%s0 + $0x78] sm:$0xff]
  %v152 = vld [vmem:[%s0 + $0x80] sm:$0xff]
  %v153 = vld [vmem:[%s0 + $0x88] sm:$0xff]
  %v154 = vld [vmem:[%s0 + $0x90] sm:$0xff]
  %v155 = vld [vmem:[%s0 + $0x98] sm:$0xff]
  %v156 = vld [vmem:[%s0 + $0xa0] sm:$0xff]
  %v157 = vld [vmem:[%s0 + $0xa8] sm:$0xff]
  %v158 = vld [vmem:[%s0 + $0xb0] sm:$0xff]
  %v159 = vld [vmem:[%s0 + $0xb8] sm:$0xff]
  %v160 = vld [vmem:[%s0 + $0xc0] sm:$0xff]
  %v161 = vld [vmem:[%s0 + $0xc8] sm:$0xff]
  %v162 = vld [vmem:[%s0 + $0xd0] sm:$0xff]
  %v163 = vld [vmem:[%s0 + $0xd8] sm:$0xff]
  %v164 = vld [vmem:[%s0 + $0xe0] sm:$0xff]
  %v165 = vld [vmem:[%s0 + $0xe8] sm:$0xff]
  %v166 = vld [vmem:[%s0 + $0xf0] sm:$0xff]
  %v167 = vld [vmem:[%s0 + $0xf8] sm:$0xff]
  %v168 = vld [vmem:[%s0 + $0x100] sm:$0xff]
  %v169 = vld [vmem:[%s0 + $0x108] sm:$0xff]
  %v170 = vld [vmem:[%s0 + $0x110] sm:$0xff]
  %v171 = vld [vmem:[%s0 + $0x118] sm:$0xff]
  %v172 = vld [vmem:[%s0 + $0x120] sm:$0xff]
  %v173 = vld [vmem:[%s0 + $0x128] sm:$0xff]
  %v174 = vld [vmem:[%s0 + $0x130] sm:$0xff]
  %v175 = vld [vmem:[%s0 + $0x138] sm:$0xff]
  %v176 = vld [vmem:[%s0 + $0x140] sm:$0xff]
  %v177 = vld [vmem:[%s0 + $0x148] sm:$0xff]
  %v178 = vld [vmem:[%s0 + $0x150] sm:$0xff]
  %v179 = vld [vmem:[%s0 + $0x158] sm:$0xff]
  %v180 = vld [vmem:[%s0 + $0x160] sm:$0xff]
  %v181 = vld [vmem:[%s0 + $0x168] sm:$0xff]
  %v182 = vld [vmem:[%s0 + $0x170] sm:$0xff]
  %v183 = vld [vmem:[%s0 + $0x178] sm:$0xff]
  %v184 = vld [vmem:[%s0 + $0x180] sm:$0xff]
  %v185 = vld [vmem:[%s0 + $0x188] sm:$0xff]
  %v186 = vld [vmem:[%s0 + $0x190] sm:$0xff]
  %v187 = vld [vmem:[%s0 + $0x198] sm:$0xff]
  %v188 = vld [vmem:[%s0 + $0x1a0] sm:$0xff]
  %v189 = vld [vmem:[%s0 + $0x1a8] sm:$0xff]
  %v190 = vld [vmem:[%s0 + $0x1b0] sm:$0xff]
  %v191 = vld [vmem:[%s0 + $0x1b8] sm:$0xff]
  %v192 = vld [vmem:[%s0 + $0x1c0] sm:$0xff]
  %v193 = vld [vmem:[%s0 + $0x1c8] sm:$0xff]
  %v194 = vld [vmem:[%s0 + $0x1d0] sm:$0xff]
  %v195 = vld [vmem:[%s0 + $0x1d8] sm:$0xff]
  %v196 = vld [vmem:[%s0 + $0x1e0] sm:$0xff]
  %v197 = vld [vmem:[%s0 + $0x1e8] sm:$0xff]
  %v198 = vld [vmem:[%s0 + $0x1f0] sm:$0xff]
  %v199 = vld [vmem:[%s0 + $0x1f8] sm:$0xff]
  %v200 = vld [vmem:[%s0 + $0x200] sm:$0xff]
  %v201 = vld [vmem:[%s0 + $0x208] sm:$0xff]
  %v202 = vld [vmem:[%s0 + $0x210] sm:$0xff]
  %v203 = vld [vmem:[%s0 + $0x218] sm:$0xff]
  %v204 = vld [vmem:[%s0 + $0x220] sm:$0xff]
  %v205 = vld [vmem:[%s0 + $0x228] sm:$0xff]
  %v206 = vld [vmem:[%s0 + $0x230] sm:$0xff]
  %v207 = vld [vmem:[%s0 + $0x238] sm:$0xff]
  %v208 = vld [vmem:[%s0 + $0x240] sm:$0xff]
  %v209 = vld [vmem:[%s0 + $0x248] sm:$0xff]
  %v210 = vld [vmem:[%s0 + $0x250] sm:$0xff]
  %v211 = vld [vmem:[%s0 + $0x258] sm:$0xff]
  %v212 = vld [vmem:[%s0 + $0x260] sm:$0xff]
  %v213 = vld [vmem:[%s0 + $0x268] sm:$0xff]
  %v214 = vld [vmem:[%s0 + $0x270] sm:$0xff]
  %v215 = vld [vmem:[%s0 + $0x278] sm:$0xff]
  %v216 = vld [vmem:[%s0 + $0x280] sm:$0xff]
  %v217 = vld [vmem:[%s0 + $0x288] sm:$0xff]
  %v218 = vld [vmem:[%s0 + $0x290] sm:$0xff]
  %v219 = vld [vmem:[%s0 + $0x298] sm:$0xff]
  %v220 = vld [vmem:[%s0 + $0x2a0] sm:$0xff]
  %v221 = vld [vmem:[%s0 + $0x2a8] sm:$0xff]
  %v222 = vld [vmem:[%s0 + $0x2b0] sm:$0xff]
  %v223 = vld [vmem:[%s0 + $0x2b8] sm:$0xff]
  %v224 = vld [vmem:[%s0 + $0x2c0] sm:$0xff]
  %v225 = vld [vmem:[%s0 + $0x2c8] sm:$0xff]
  %v226 = vld [vmem:[%s0 + $0x2d0] sm:$0xff]
  %v227 = vld [vmem:[%s0 + $0x2d8] sm:$0xff]
  %v228 = vld [vmem:[%s0 + $0x2e0] sm:$0xff]
  %v229 = vld [vmem:[%s0 + $0x2e8] sm:$0xff]
  %v230 = vld [vmem:[%s0 + $0x2f0] sm:$0xff]
  %v231 = vld [vmem:[%s0 + $0x2f8] sm:$0xff]
  %232 = vmatprep.subr.mxu0 %v137
  %233 = vmatpush1.msra.mxu0 %v136
  %234 = vmatprep.subr.mxu0 %v139
  %235 = vmatpush1.msra.mxu0 %v138
  %236 = vmatprep.subr.mxu0 %v141
  %237 = vmatpush1.msra.mxu0 %v140
  %238 = vmatprep.subr.mxu0 %v143
  %239 = vmatpush1.msra.mxu0 %v142
  %240 = vmatprep.subr.mxu0 %v145
  %241 = vmatpush1.msra.mxu0 %v144
  %242 = vmatprep.subr.mxu0 %v147
  %243 = vmatpush1.msra.mxu0 %v146
  %244 = vmatprep.subr.mxu0 %v149
  %245 = vmatpush1.msra.mxu0 %v148
  %246 = vmatprep.subr.mxu0 %v151
  %247 = vmatpush1.msra.mxu0 %v150
  %248 = vmatprep.subr.mxu0 %v153
  %249 = vmatpush1.msra.mxu0 %v152
  %250 = vmatprep.subr.mxu0 %v155
  %251 = vmatpush1.msra.mxu0 %v154
  %252 = vmatprep.subr.mxu0 %v157
  %253 = vmatpush1.msra.mxu0 %v156
  %254 = vmatprep.subr.mxu0 %v159
  %255 = vmatpush1.msra.mxu0 %v158
  %256 = vmatprep.subr.mxu0 %v161
  %257 = vmatpush1.msra.mxu0 %v160
  %258 = vmatprep.subr.mxu0 %v163
  %259 = vmatpush1.msra.mxu0 %v162
  %260 = vmatprep.subr.mxu0 %v165
  %261 = vmatpush1.msra.mxu0 %v164
  %262 = vmatprep.subr.mxu0 %v167
  %263 = vmatpush1.msra.mxu0 %v166
  %264 = vmatprep.subr.mxu0 %v169
  %265 = vmatpush1.msra.mxu0 %v168
  %266 = vmatprep.subr.mxu0 %v171
  %267 = vmatpush1.msra.mxu0 %v170
  %268 = vmatprep.subr.mxu0 %v173
  %269 = vmatpush1.msra.mxu0 %v172
  %270 = vmatprep.subr.mxu0 %v175
  %271 = vmatpush1.msra.mxu0 %v174
  %272 = vmatprep.subr.mxu0 %v177
  %273 = vmatpush1.msra.mxu0 %v176
  %274 = vmatprep.subr.mxu0 %v179
  %275 = vmatpush1.msra.mxu0 %v178
  %276 = vmatprep.subr.mxu0 %v181
  %277 = vmatpush1.msra.mxu0 %v180
  %278 = vmatprep.subr.mxu0 %v183
  %279 = vmatpush1.msra.mxu0 %v182
  %280 = vmatprep.subr.mxu0 %v185
  %281 = vmatpush1.msra.mxu0 %v184
  %282 = vmatprep.subr.mxu0 %v187
  %283 = vmatpush1.msra.mxu0 %v186
  %284 = vmatprep.subr.mxu0 %v189
  %285 = vmatpush1.msra.mxu0 %v188
  %286 = vmatprep.subr.mxu0 %v191
  %287 = vmatpush1.msra.mxu0 %v190
  %288 = vmatprep.subr.mxu0 %v193
  %289 = vmatpush1.msra.mxu0 %v192
  %290 = vmatprep.subr.mxu0 %v195
  %291 = vmatpush1.msra.mxu0 %v194
  %292 = vmatprep.subr.mxu0 %v197
  %293 = vmatpush1.msra.mxu0 %v196
  %294 = vmatprep.subr.mxu0 %v199
  %295 = vmatpush1.msra.mxu0 %v198
  %296 = vmatprep.mubr.f32.mxu0 %v89
  %297 = vmatmul.mubr.f32.gmra.mrb[0].mxu0 %v88
  %v298 = vpop.f32.mrb[0].mxu0
  %v299 = vadd.f32 0.0, %v298
  %v300 = vpop.f32.mrb[0].mxu0
  %v301 = vadd.f32 0.0, %v300
  %302 = vmatprep.mubr.f32.mxu0 %v92
  %303 = vmatmul.mubr.f32.gmra.mrb[0].mxu0 %v91
  %v304 = vpop.f32.mrb[0].mxu0
  %v305 = vadd.f32 0.0, %v304
  %v306 = vpop.f32.mrb[0].mxu0
  %v307 = vadd.f32 0.0, %v306
  %308 = vmatprep.mubr.f32.mxu0 %v95
  %309 = vmatmul.mubr.f32.gmra.mrb[0].mxu0 %v94
  %v310 = vpop.f32.mrb[0].mxu0
  %v311 = vadd.f32 0.0, %v310
  %v312 = vpop.f32.mrb[0].mxu0
  %v313 = vadd.f32 0.0, %v312
  %314 = vmatprep.mubr.f32.mxu0 %v98
  %315 = vmatmul.mubr.f32.gmra.mrb[0].mxu0 %v97
  %v316 = vpop.f32.mrb[0].mxu0
  %v317 = vadd.f32 0.0, %v316
  %v318 = vpop.f32.mrb[0].mxu0
  %v319 = vadd.f32 0.0, %v318
  %320 = vmatprep.mubr.f32.mxu0 %v101
  %321 = vmatmul.mubr.f32.gmra.mrb[0].mxu0 %v100
  %v322 = vpop.f32.mrb[0].mxu0
  %v323 = vadd.f32 0.0, %v322
  %v324 = vpop.f32.mrb[0].mxu0
  %v325 = vadd.f32 0.0, %v324
  %326 = vmatprep.mubr.f32.mxu0 %v104
  %327 = vmatmul.mubr.f32.gmra.mrb[0].mxu0 %v103
  %v328 = vpop.f32.mrb[0].mxu0
  %v329 = vadd.f32 0.0, %v328
  %v330 = vpop.f32.mrb[0].mxu0
  %v331 = vadd.f32 0.0, %v330
  %332 = vmatprep.mubr.f32.mxu0 %v107
  %333 = vmatmul.mubr.f32.gmra.mrb[0].mxu0 %v106
  %v334 = vpop.f32.mrb[0].mxu0
  %v335 = vadd.f32 0.0, %v334
  %v336 = vpop.f32.mrb[0].mxu0
  %v337 = vadd.f32 0.0, %v336
  %338 = vmatprep.mubr.f32.mxu0 %v110
  %339 = vmatmul.mubr.f32.gmra.mrb[0].mxu0 %v109
  %v340 = vpop.f32.mrb[0].mxu0
  %v341 = vadd.f32 0.0, %v340
  %v342 = vpop.f32.mrb[0].mxu0
  %v343 = vadd.f32 0.0, %v342
  %344 = vmatprep.mubr.f32.mxu0 %v113
  %345 = vmatmul.mubr.f32.gmra.mrb[0].mxu0 %v112
  %v346 = vpop.f32.mrb[0].mxu0
  %v347 = vadd.f32 0.0, %v346
  %v348 = vpop.f32.mrb[0].mxu0
  %v349 = vadd.f32 0.0, %v348
  %350 = vmatprep.mubr.f32.mxu0 %v116
  %351 = vmatmul.mubr.f32.gmra.mrb[0].mxu0 %v115
  %v352 = vpop.f32.mrb[0].mxu0
  %v353 = vadd.f32 0.0, %v352
  %v354 = vpop.f32.mrb[0].mxu0
  %v355 = vadd.f32 0.0, %v354
  %356 = vmatprep.mubr.f32.mxu0 %v119
  %357 = vmatmul.mubr.f32.gmra.mrb[0].mxu0 %v118
  %v358 = vpop.f32.mrb[0].mxu0
  %v359 = vadd.f32 0.0, %v358
  %v360 = vpop.f32.mrb[0].mxu0
  %v361 = vadd.f32 0.0, %v360
  %362 = vmatprep.mubr.f32.mxu0 %v122
  %363 = vmatmul.mubr.f32.gmra.mrb[0].mxu0 %v121
  %v364 = vpop.f32.mrb[0].mxu0
  %v365 = vadd.f32 0.0, %v364
  %v366 = vpop.f32.mrb[0].mxu0
  %v367 = vadd.f32 0.0, %v366
  %368 = vmatprep.mubr.f32.mxu0 %v125
  %369 = vmatmul.mubr.f32.gmra.mrb[0].mxu0 %v124
  %v370 = vpop.f32.mrb[0].mxu0
  %v371 = vadd.f32 0.0, %v370
  %v372 = vpop.f32.mrb[0].mxu0
  %v373 = vadd.f32 0.0, %v372
  %374 = vmatprep.mubr.f32.mxu0 %v128
  %375 = vmatmul.mubr.f32.gmra.mrb[0].mxu0 %v127
  %v376 = vpop.f32.mrb[0].mxu0
  %v377 = vadd.f32 0.0, %v376
  %v378 = vpop.f32.mrb[0].mxu0
  %v379 = vadd.f32 0.0, %v378
  %380 = vmatprep.mubr.f32.mxu0 %v131
  %381 = vmatmul.mubr.f32.gmra.mrb[0].mxu0 %v130
  %v382 = vpop.f32.mrb[0].mxu0
  %v383 = vadd.f32 0.0, %v382
  %v384 = vpop.f32.mrb[0].mxu0
  %v385 = vadd.f32 0.0, %v384
  %386 = vmatprep.mubr.f32.mxu0 %v134
  %387 = vmatmul.mubr.f32.gmra.mrb[0].mxu0 %v133
  %v388 = vpop.f32.mrb[0].mxu0
  %v389 = vadd.f32 0.0, %v388
  %v390 = vpop.f32.mrb[0].mxu0
  %v391 = vadd.f32 0.0, %v390
  %392 = vdwg.mxu0
  %393 = vmatprep.subr.mxu0 %v201
  %394 = vmatpush1.msra.mxu0 %v200
  %395 = vmatprep.subr.mxu0 %v203
  %396 = vmatpush1.msra.mxu0 %v202
  %397 = vmatprep.subr.mxu0 %v205
  %398 = vmatpush1.msra.mxu0 %v204
  %399 = vmatprep.subr.mxu0 %v207
  %400 = vmatpush1.msra.mxu0 %v206
  %401 = vmatprep.subr.mxu0 %v209
  %402 = vmatpush1.msra.mxu0 %v208
  %403 = vmatprep.subr.mxu0 %v211
  %404 = vmatpush1.msra.mxu0 %v210
  %405 = vmatprep.subr.mxu0 %v213
  %406 = vmatpush1.msra.mxu0 %v212
  %407 = vmatprep.subr.mxu0 %v215
  %408 = vmatpush1.msra.mxu0 %v214
  %409 = vmatprep.subr.mxu0 %v217
  %410 = vmatpush1.msra.mxu0 %v216
  %411 = vmatprep.subr.mxu0 %v219
  %412 = vmatpush1.msra.mxu0 %v218
  %413 = vmatprep.subr.mxu0 %v221
  %414 = vmatpush1.msra.mxu0 %v220
  %415 = vmatprep.subr.mxu0 %v223
  %416 = vmatpush1.msra.mxu0 %v222
  %417 = vmatprep.subr.mxu0 %v225
  %418 = vmatpush1.msra.mxu0 %v224
  %419 = vmatprep.subr.mxu0 %v227
  %420 = vmatpush1.msra.mxu0 %v226
  %421 = vmatprep.subr.mxu0 %v229
  %422 = vmatpush1.msra.mxu0 %v228
  %423 = vmatprep.subr.mxu0 %v231
  %424 = vmatpush1.msra.mxu0 %v230
  %425 = vmatprep.subr.mxu0 0.0
  %426 = vmatpush1.msra.mxu0 0.0
  %427 = vmatprep.subr.mxu0 0.0
  %428 = vmatpush1.msra.mxu0 0.0
  %429 = vmatprep.subr.mxu0 0.0
  %430 = vmatpush1.msra.mxu0 0.0
  %431 = vmatprep.subr.mxu0 0.0
  %432 = vmatpush1.msra.mxu0 0.0
  %433 = vmatprep.subr.mxu0 0.0
  %434 = vmatpush1.msra.mxu0 0.0
  %435 = vmatprep.subr.mxu0 0.0
  %436 = vmatpush1.msra.mxu0 0.0
  %437 = vmatprep.subr.mxu0 0.0
  %438 = vmatpush1.msra.mxu0 0.0
  %439 = vmatprep.subr.mxu0 0.0
  %440 = vmatpush1.msra.mxu0 0.0
  %441 = vmatprep.subr.mxu0 0.0
  %442 = vmatpush1.msra.mxu0 0.0
  %443 = vmatprep.subr.mxu0 0.0
  %444 = vmatpush1.msra.mxu0 0.0
  %445 = vmatprep.subr.mxu0 0.0
  %446 = vmatpush1.msra.mxu0 0.0
  %447 = vmatprep.subr.mxu0 0.0
  %448 = vmatpush1.msra.mxu0 0.0
  %449 = vmatprep.subr.mxu0 0.0
  %450 = vmatpush1.msra.mxu0 0.0
  %451 = vmatprep.subr.mxu0 0.0
  %452 = vmatpush1.msra.mxu0 0.0
  %453 = vmatprep.subr.mxu0 0.0
  %454 = vmatpush1.msra.mxu0 0.0
  %455 = vmatprep.subr.mxu0 0.0
  %456 = vmatpush1.msra.mxu0 0.0
  %457 = vmatprep.mubr.f32.mxu0 0.0
  %458 = vmatmul.mubr.f32.gmra.mrb[0].mxu0 %v90
  %v459 = vpop.f32.mrb[0].mxu0
  %v460 = vadd.f32 %v299, %v459
  %v461 = vpop.f32.mrb[0].mxu0
  %v462 = vadd.f32 %v301, %v461
  %463 = vmatprep.mubr.f32.mxu0 0.0
  %464 = vmatmul.mubr.f32.gmra.mrb[0].mxu0 %v93
  %v465 = vpop.f32.mrb[0].mxu0
  %v466 = vadd.f32 %v305, %v465
  %v467 = vpop.f32.mrb[0].mxu0
  %v468 = vadd.f32 %v307, %v467
  %469 = vmatprep.mubr.f32.mxu0 0.0
  %470 = vmatmul.mubr.f32.gmra.mrb[0].mxu0 %v96
  %v471 = vpop.f32.mrb[0].mxu0
  %v472 = vadd.f32 %v311, %v471
  %v473 = vpop.f32.mrb[0].mxu0
  %v474 = vadd.f32 %v313, %v473
  %475 = vmatprep.mubr.f32.mxu0 0.0
  %476 = vmatmul.mubr.f32.gmra.mrb[0].mxu0 %v99
  %v477 = vpop.f32.mrb[0].mxu0
  %v478 = vadd.f32 %v317, %v477
  %v479 = vpop.f32.mrb[0].mxu0
  %v480 = vadd.f32 %v319, %v479
  %481 = vmatprep.mubr.f32.mxu0 0.0
  %482 = vmatmul.mubr.f32.gmra.mrb[0].mxu0 %v102
  %v483 = vpop.f32.mrb[0].mxu0
  %v484 = vadd.f32 %v323, %v483
  %v485 = vpop.f32.mrb[0].mxu0
  %v486 = vadd.f32 %v325, %v485
  %487 = vmatprep.mubr.f32.mxu0 0.0
  %488 = vmatmul.mubr.f32.gmra.mrb[0].mxu0 %v105
  %v489 = vpop.f32.mrb[0].mxu0
  %v490 = vadd.f32 %v329, %v489
  %v491 = vpop.f32.mrb[0].mxu0
  %v492 = vadd.f32 %v331, %v491
  %493 = vmatprep.mubr.f32.mxu0 0.0
  %494 = vmatmul.mubr.f32.gmra.mrb[0].mxu0 %v108
  %v495 = vpop.f32.mrb[0].mxu0
  %v496 = vadd.f32 %v335, %v495
  %v497 = vpop.f32.mrb[0].mxu0
  %v498 = vadd.f32 %v337, %v497
  %499 = vmatprep.mubr.f32.mxu0 0.0
  %500 = vmatmul.mubr.f32.gmra.mrb[0].mxu0 %v111
  %v501 = vpop.f32.mrb[0].mxu0
  %v502 = vadd.f32 %v341, %v501
  %v503 = vpop.f32.mrb[0].mxu0
  %v504 = vadd.f32 %v343, %v503
  %505 = vmatprep.mubr.f32.mxu0 0.0
  %506 = vmatmul.mubr.f32.gmra.mrb[0].mxu0 %v114
  %v507 = vpop.f32.mrb[0].mxu0
  %v508 = vadd.f32 %v347, %v507
  %v509 = vpop.f32.mrb[0].mxu0
  %v510 = vadd.f32 %v349, %v509
  %511 = vmatprep.mubr.f32.mxu0 0.0
  %512 = vmatmul.mubr.f32.gmra.mrb[0].mxu0 %v117
  %v513 = vpop.f32.mrb[0].mxu0
  %v514 = vadd.f32 %v353, %v513
  %v515 = vpop.f32.mrb[0].mxu0
  %v516 = vadd.f32 %v355, %v515
  %517 = vmatprep.mubr.f32.mxu0 0.0
  %518 = vmatmul.mubr.f32.gmra.mrb[0].mxu0 %v120
  %v519 = vpop.f32.mrb[0].mxu0
  %v520 = vadd.f32 %v359, %v519
  %v521 = vpop.f32.mrb[0].mxu0
  %v522 = vadd.f32 %v361, %v521
  %523 = vmatprep.mubr.f32.mxu0 0.0
  %524 = vmatmul.mubr.f32.gmra.mrb[0].mxu0 %v123
  %v525 = vpop.f32.mrb[0].mxu0
  %v526 = vadd.f32 %v365, %v525
  %v527 = vpop.f32.mrb[0].mxu0
  %v528 = vadd.f32 %v367, %v527
  %529 = vmatprep.mubr.f32.mxu0 0.0
  %530 = vmatmul.mubr.f32.gmra.mrb[0].mxu0 %v126
  %v531 = vpop.f32.mrb[0].mxu0
  %v532 = vadd.f32 %v371, %v531
  %v533 = vpop.f32.mrb[0].mxu0
  %v534 = vadd.f32 %v373, %v533
  %535 = vmatprep.mubr.f32.mxu0 0.0
  %536 = vmatmul.mubr.f32.gmra.mrb[0].mxu0 %v129
  %v537 = vpop.f32.mrb[0].mxu0
  %v538 = vadd.f32 %v377, %v537
  %v539 = vpop.f32.mrb[0].mxu0
  %v540 = vadd.f32 %v379, %v539
  %541 = vmatprep.mubr.f32.mxu0 0.0
  %542 = vmatmul.mubr.f32.gmra.mrb[0].mxu0 %v132
  %v543 = vpop.f32.mrb[0].mxu0
  %v544 = vadd.f32 %v383, %v543
  %v545 = vpop.f32.mrb[0].mxu0
  %v546 = vadd.f32 %v385, %v545
  %547 = vmatprep.mubr.f32.mxu0 0.0
  %548 = vmatmul.mubr.f32.gmra.mrb[0].mxu0 %v135
  %v549 = vpop.f32.mrb[0].mxu0
  %v550 = vadd.f32 %v389, %v549
  %v551 = vpop.f32.mrb[0].mxu0
  %v552 = vadd.f32 %v391, %v551
  %553 = vdwg.mxu0
  %vm554 = vcmask 556032
  %v555 = vsel %vm554, %v462, 0.0
  %v556 = vadd.f32 %v460, %v555
  %557 = vadd.xlane.f32.xlu0 %v556
  %v558 = vpop.xlane.xlu0 %557
  %v559 = vsel %vm554, %v468, 0.0
  %v560 = vadd.f32 %v466, %v559
  %561 = vadd.xlane.f32.xlu0 %v560
  %v562 = vpop.xlane.xlu0 %561
  %v563 = vsel %vm554, %v474, 0.0
  %v564 = vadd.f32 %v472, %v563
  %565 = vadd.xlane.f32.xlu0 %v564
  %v566 = vpop.xlane.xlu0 %565
  %v567 = vsel %vm554, %v480, 0.0
  %v568 = vadd.f32 %v478, %v567
  %569 = vadd.xlane.f32.xlu0 %v568
  %v570 = vpop.xlane.xlu0 %569
  %v571 = vsel %vm554, %v486, 0.0
  %v572 = vadd.f32 %v484, %v571
  %573 = vadd.xlane.f32.xlu0 %v572
  %v574 = vpop.xlane.xlu0 %573
  %v575 = vsel %vm554, %v492, 0.0
  %v576 = vadd.f32 %v490, %v575
  %577 = vadd.xlane.f32.xlu0 %v576
  %v578 = vpop.xlane.xlu0 %577
  %v579 = vsel %vm554, %v498, 0.0
  %v580 = vadd.f32 %v496, %v579
  %581 = vadd.xlane.f32.xlu0 %v580
  %v582 = vpop.xlane.xlu0 %581
  %v583 = vsel %vm554, %v504, 0.0
  %v584 = vadd.f32 %v502, %v583
  %585 = vadd.xlane.f32.xlu0 %v584
  %v586 = vpop.xlane.xlu0 %585
  %v587 = vsel %vm554, %v510, 0.0
  %v588 = vadd.f32 %v508, %v587
  %589 = vadd.xlane.f32.xlu0 %v588
  %v590 = vpop.xlane.xlu0 %589
  %v591 = vsel %vm554, %v516, 0.0
  %v592 = vadd.f32 %v514, %v591
  %593 = vadd.xlane.f32.xlu0 %v592
  %v594 = vpop.xlane.xlu0 %593
  %v595 = vsel %vm554, %v522, 0.0
  %v596 = vadd.f32 %v520, %v595
  %597 = vadd.xlane.f32.xlu0 %v596
  %v598 = vpop.xlane.xlu0 %597
  %v599 = vsel %vm554, %v528, 0.0
  %v600 = vadd.f32 %v526, %v599
  %601 = vadd.xlane.f32.xlu0 %v600
  %v602 = vpop.xlane.xlu0 %601
  %v603 = vsel %vm554, %v534, 0.0
  %v604 = vadd.f32 %v532, %v603
  %605 = vadd.xlane.f32.xlu0 %v604
  %v606 = vpop.xlane.xlu0 %605
  %v607 = vsel %vm554, %v540, 0.0
  %v608 = vadd.f32 %v538, %v607
  %609 = vadd.xlane.f32.xlu0 %v608
  %v610 = vpop.xlane.xlu0 %609
  %v611 = vsel %vm554, %v546, 0.0
  %v612 = vadd.f32 %v544, %v611
  %613 = vadd.xlane.f32.xlu0 %v612
  %v614 = vpop.xlane.xlu0 %613
  %v615 = vsel %vm554, %v552, 0.0
  %v616 = vadd.f32 %v550, %v615
  %617 = vadd.xlane.f32.xlu0 %v616
  %v618 = vpop.xlane.xlu0 %617
  %v619 = vmul.f32 %v460, %v460
  %v620 = vmul.f32 %v462, %v462
  %v621 = vmul.f32 %v466, %v466
  %v622 = vmul.f32 %v468, %v468
  %v623 = vmul.f32 %v472, %v472
  %v624 = vmul.f32 %v474, %v474
  %v625 = vmul.f32 %v478, %v478
  %v626 = vmul.f32 %v480, %v480
  %v627 = vmul.f32 %v484, %v484
  %v628 = vmul.f32 %v486, %v486
  %v629 = vmul.f32 %v490, %v490
  %v630 = vmul.f32 %v492, %v492
  %v631 = vmul.f32 %v496, %v496
  %v632 = vmul.f32 %v498, %v498
  %v633 = vmul.f32 %v502, %v502
  %v634 = vmul.f32 %v504, %v504
  %v635 = vmul.f32 %v508, %v508
  %v636 = vmul.f32 %v510, %v510
  %v637 = vmul.f32 %v514, %v514
  %v638 = vmul.f32 %v516, %v516
  %v639 = vmul.f32 %v520, %v520
  %v640 = vmul.f32 %v522, %v522
  %v641 = vmul.f32 %v526, %v526
  %v642 = vmul.f32 %v528, %v528
  %v643 = vmul.f32 %v532, %v532
  %v644 = vmul.f32 %v534, %v534
  %v645 = vmul.f32 %v538, %v538
  %v646 = vmul.f32 %v540, %v540
  %v647 = vmul.f32 %v544, %v544
  %v648 = vmul.f32 %v546, %v546
  %v649 = vmul.f32 %v550, %v550
  %v650 = vmul.f32 %v552, %v552
  %v651 = vsel %vm554, %v620, 0.0
  %v652 = vadd.f32 %v619, %v651
  %653 = vadd.xlane.f32.xlu0 %v652
  %v654 = vpop.xlane.xlu0 %653
  %v655 = vsel %vm554, %v622, 0.0
  %v656 = vadd.f32 %v621, %v655
  %657 = vadd.xlane.f32.xlu0 %v656
  %v658 = vpop.xlane.xlu0 %657
  %v659 = vsel %vm554, %v624, 0.0
  %v660 = vadd.f32 %v623, %v659
  %661 = vadd.xlane.f32.xlu0 %v660
  %v662 = vpop.xlane.xlu0 %661
  %v663 = vsel %vm554, %v626, 0.0
  %v664 = vadd.f32 %v625, %v663
  %665 = vadd.xlane.f32.xlu0 %v664
  %v666 = vpop.xlane.xlu0 %665
  %v667 = vsel %vm554, %v628, 0.0
  %v668 = vadd.f32 %v627, %v667
  %669 = vadd.xlane.f32.xlu0 %v668
  %v670 = vpop.xlane.xlu0 %669
  %v671 = vsel %vm554, %v630, 0.0
  %v672 = vadd.f32 %v629, %v671
  %673 = vadd.xlane.f32.xlu0 %v672
  %v674 = vpop.xlane.xlu0 %673
  %v675 = vsel %vm554, %v632, 0.0
  %v676 = vadd.f32 %v631, %v675
  %677 = vadd.xlane.f32.xlu0 %v676
  %v678 = vpop.xlane.xlu0 %677
  %v679 = vsel %vm554, %v634, 0.0
  %v680 = vadd.f32 %v633, %v679
  %681 = vadd.xlane.f32.xlu0 %v680
  %v682 = vpop.xlane.xlu0 %681
  %v683 = vsel %vm554, %v636, 0.0
  %v684 = vadd.f32 %v635, %v683
  %685 = vadd.xlane.f32.xlu0 %v684
  %v686 = vpop.xlane.xlu0 %685
  %v687 = vsel %vm554, %v638, 0.0
  %v688 = vadd.f32 %v637, %v687
  %689 = vadd.xlane.f32.xlu0 %v688
  %v690 = vpop.xlane.xlu0 %689
  %v691 = vsel %vm554, %v640, 0.0
  %v692 = vadd.f32 %v639, %v691
  %693 = vadd.xlane.f32.xlu0 %v692
  %v694 = vpop.xlane.xlu0 %693
  %v695 = vsel %vm554, %v642, 0.0
  %v696 = vadd.f32 %v641, %v695
  %697 = vadd.xlane.f32.xlu0 %v696
  %v698 = vpop.xlane.xlu0 %697
  %v699 = vsel %vm554, %v644, 0.0
  %v700 = vadd.f32 %v643, %v699
  %701 = vadd.xlane.f32.xlu0 %v700
  %v702 = vpop.xlane.xlu0 %701
  %v703 = vsel %vm554, %v646, 0.0
  %v704 = vadd.f32 %v645, %v703
  %705 = vadd.xlane.f32.xlu0 %v704
  %v706 = vpop.xlane.xlu0 %705
  %v707 = vsel %vm554, %v648, 0.0
  %v708 = vadd.f32 %v647, %v707
  %709 = vadd.xlane.f32.xlu0 %v708
  %v710 = vpop.xlane.xlu0 %709
  %v711 = vsel %vm554, %v650, 0.0
  %v712 = vadd.f32 %v649, %v711
  %713 = vadd.xlane.f32.xlu0 %v712
  %v714 = vpop.xlane.xlu0 %713
  %v715 = vmul.f32 %v558, 0.0051020407
  %v716 = vmul.f32 %v562, 0.0051020407
  %v717 = vmul.f32 %v566, 0.0051020407
  %v718 = vmul.f32 %v570, 0.0051020407
  %v719 = vmul.f32 %v574, 0.0051020407
  %v720 = vmul.f32 %v578, 0.0051020407
  %v721 = vmul.f32 %v582, 0.0051020407
  %v722 = vmul.f32 %v586, 0.0051020407
  %v723 = vmul.f32 %v590, 0.0051020407
  %v724 = vmul.f32 %v594, 0.0051020407
  %v725 = vmul.f32 %v598, 0.0051020407
  %v726 = vmul.f32 %v602, 0.0051020407
  %v727 = vmul.f32 %v606, 0.0051020407
  %v728 = vmul.f32 %v610, 0.0051020407
  %v729 = vmul.f32 %v614, 0.0051020407
  %v730 = vmul.f32 %v618, 0.0051020407
  %v731 = vmul.f32 %v654, 0.0051020407
  %v732 = vmul.f32 %v658, 0.0051020407
  %v733 = vmul.f32 %v662, 0.0051020407
  %v734 = vmul.f32 %v666, 0.0051020407
  %v735 = vmul.f32 %v670, 0.0051020407
  %v736 = vmul.f32 %v674, 0.0051020407
  %v737 = vmul.f32 %v678, 0.0051020407
  %v738 = vmul.f32 %v682, 0.0051020407
  %v739 = vmul.f32 %v686, 0.0051020407
  %v740 = vmul.f32 %v690, 0.0051020407
  %v741 = vmul.f32 %v694, 0.0051020407
  %v742 = vmul.f32 %v698, 0.0051020407
  %v743 = vmul.f32 %v702, 0.0051020407
  %v744 = vmul.f32 %v706, 0.0051020407
  %v745 = vmul.f32 %v710, 0.0051020407
  %v746 = vmul.f32 %v714, 0.0051020407
  %v747 = vmul.f32 %v715, %v715
  %v748 = vmul.f32 %v716, %v716
  %v749 = vmul.f32 %v717, %v717
  %v750 = vmul.f32 %v718, %v718
  %v751 = vmul.f32 %v719, %v719
  %v752 = vmul.f32 %v720, %v720
  %v753 = vmul.f32 %v721, %v721
  %v754 = vmul.f32 %v722, %v722
  %v755 = vmul.f32 %v723, %v723
  %v756 = vmul.f32 %v724, %v724
  %v757 = vmul.f32 %v725, %v725
  %v758 = vmul.f32 %v726, %v726
  %v759 = vmul.f32 %v727, %v727
  %v760 = vmul.f32 %v728, %v728
  %v761 = vmul.f32 %v729, %v729
  %v762 = vmul.f32 %v730, %v730
  %v763 = vsub.f32 %v731, %v747
  %v764 = vsub.f32 %v732, %v748
  %v765 = vsub.f32 %v733, %v749
  %v766 = vsub.f32 %v734, %v750
  %v767 = vsub.f32 %v735, %v751
  %v768 = vsub.f32 %v736, %v752
  %v769 = vsub.f32 %v737, %v753
  %v770 = vsub.f32 %v738, %v754
  %v771 = vsub.f32 %v739, %v755
  %v772 = vsub.f32 %v740, %v756
  %v773 = vsub.f32 %v741, %v757
  %v774 = vsub.f32 %v742, %v758
  %v775 = vsub.f32 %v743, %v759
  %v776 = vsub.f32 %v744, %v760
  %v777 = vsub.f32 %v745, %v761
  %v778 = vsub.f32 %v746, %v762
  %v779 = vld [vmem:[%s3] sm:$0xff]
  %v780 = vld [vmem:[%s3 + $0x8] sm:$0xff]
  %v781 = vld [vmem:[%s3 + $0x10] sm:$0xff]
  %v782 = vld [vmem:[%s3 + $0x18] sm:$0xff]
  %v783 = vld [vmem:[%s3 + $0x20] sm:$0xff]
  %v784 = vld [vmem:[%s3 + $0x28] sm:$0xff]
  %v785 = vld [vmem:[%s3 + $0x30] sm:$0xff]
  %v786 = vld [vmem:[%s3 + $0x38] sm:$0xff]
  %v787 = vld [vmem:[%s3 + $0x40] sm:$0xff]
  %v788 = vld [vmem:[%s3 + $0x48] sm:$0xff]
  %v789 = vld [vmem:[%s3 + $0x50] sm:$0xff]
  %v790 = vld [vmem:[%s3 + $0x58] sm:$0xff]
  %v791 = vld [vmem:[%s3 + $0x60] sm:$0xff]
  %v792 = vld [vmem:[%s3 + $0x68] sm:$0xff]
  %v793 = vld [vmem:[%s3 + $0x70] sm:$0xff]
  %v794 = vld [vmem:[%s3 + $0x78] sm:$0xff]
  %v795 = vadd.f32 %v763, 1e-05
  %v796 = vadd.f32 %v764, 1e-05
  %v797 = vadd.f32 %v765, 1e-05
  %v798 = vadd.f32 %v766, 1e-05
  %v799 = vadd.f32 %v767, 1e-05
  %v800 = vadd.f32 %v768, 1e-05
  %v801 = vadd.f32 %v769, 1e-05
  %v802 = vadd.f32 %v770, 1e-05
  %v803 = vadd.f32 %v771, 1e-05
  %v804 = vadd.f32 %v772, 1e-05
  %v805 = vadd.f32 %v773, 1e-05
  %v806 = vadd.f32 %v774, 1e-05
  %v807 = vadd.f32 %v775, 1e-05
  %v808 = vadd.f32 %v776, 1e-05
  %v809 = vadd.f32 %v777, 1e-05
  %v810 = vadd.f32 %v778, 1e-05
  %v811 = vrsqrt.pop %v795
  %v812 = vrsqrt.pop %v796
  %v813 = vrsqrt.pop %v797
  %v814 = vrsqrt.pop %v798
  %v815 = vrsqrt.pop %v799
  %v816 = vrsqrt.pop %v800
  %v817 = vrsqrt.pop %v801
  %v818 = vrsqrt.pop %v802
  %v819 = vrsqrt.pop %v803
  %v820 = vrsqrt.pop %v804
  %v821 = vrsqrt.pop %v805
  %v822 = vrsqrt.pop %v806
  %v823 = vrsqrt.pop %v807
  %v824 = vrsqrt.pop %v808
  %v825 = vrsqrt.pop %v809
  %v826 = vrsqrt.pop %v810
  %v827 = vmul.f32 %v811, %v779
  %v828 = vmul.f32 %v812, %v780
  %v829 = vmul.f32 %v813, %v781
  %v830 = vmul.f32 %v814, %v782
  %v831 = vmul.f32 %v815, %v783
  %v832 = vmul.f32 %v816, %v784
  %v833 = vmul.f32 %v817, %v785
  %v834 = vmul.f32 %v818, %v786
  %v835 = vmul.f32 %v819, %v787
  %v836 = vmul.f32 %v820, %v788
  %v837 = vmul.f32 %v821, %v789
  %v838 = vmul.f32 %v822, %v790
  %v839 = vmul.f32 %v823, %v791
  %v840 = vmul.f32 %v824, %v792
  %v841 = vmul.f32 %v825, %v793
  %v842 = vmul.f32 %v826, %v794
  %v843 = vmul.f32 %v715, %v827
  %v844 = vmul.f32 %v716, %v828
  %v845 = vmul.f32 %v717, %v829
  %v846 = vmul.f32 %v718, %v830
  %v847 = vmul.f32 %v719, %v831
  %v848 = vmul.f32 %v720, %v832
  %v849 = vmul.f32 %v721, %v833
  %v850 = vmul.f32 %v722, %v834
  %v851 = vmul.f32 %v723, %v835
  %v852 = vmul.f32 %v724, %v836
  %v853 = vmul.f32 %v725, %v837
  %v854 = vmul.f32 %v726, %v838
  %v855 = vmul.f32 %v727, %v839
  %v856 = vmul.f32 %v728, %v840
  %v857 = vmul.f32 %v729, %v841
  %v858 = vmul.f32 %v730, %v842
  %875 = vrot.lane.b32.xlu0 %v843, 1
  %v876 = vpop.permute.xlu0 %875
  %877 = vrot.lane.b32.xlu0 %v844, 1
  %v878 = vpop.permute.xlu0 %877
  %879 = vrot.lane.b32.xlu0 %v845, 1
  %v880 = vpop.permute.xlu0 %879
  %881 = vrot.lane.b32.xlu0 %v846, 1
  %v882 = vpop.permute.xlu0 %881
  %883 = vrot.lane.b32.xlu0 %v847, 1
  %v884 = vpop.permute.xlu0 %883
  %885 = vrot.lane.b32.xlu0 %v848, 1
  %v886 = vpop.permute.xlu0 %885
  %887 = vrot.lane.b32.xlu0 %v849, 1
  %v888 = vpop.permute.xlu0 %887
  %889 = vrot.lane.b32.xlu0 %v850, 1
  %v890 = vpop.permute.xlu0 %889
  %891 = vrot.lane.b32.xlu0 %v851, 1
  %v892 = vpop.permute.xlu0 %891
  %893 = vrot.lane.b32.xlu0 %v852, 1
  %v894 = vpop.permute.xlu0 %893
  %895 = vrot.lane.b32.xlu0 %v853, 1
  %v896 = vpop.permute.xlu0 %895
  %897 = vrot.lane.b32.xlu0 %v854, 1
  %v898 = vpop.permute.xlu0 %897
  %899 = vrot.lane.b32.xlu0 %v855, 1
  %v900 = vpop.permute.xlu0 %899
  %901 = vrot.lane.b32.xlu0 %v856, 1
  %v902 = vpop.permute.xlu0 %901
  %903 = vrot.lane.b32.xlu0 %v857, 1
  %v904 = vpop.permute.xlu0 %903
  %905 = vrot.lane.b32.xlu0 %v858, 1
  %v906 = vpop.permute.xlu0 %905
  %v923 = vsub.f32 %v779, %v876
  %v924 = vsub.f32 %v780, %v878
  %v925 = vsub.f32 %v781, %v880
  %v926 = vsub.f32 %v782, %v882
  %v927 = vsub.f32 %v783, %v884
  %v928 = vsub.f32 %v784, %v886
  %v929 = vsub.f32 %v785, %v888
  %v930 = vsub.f32 %v786, %v890
  %v931 = vsub.f32 %v787, %v892
  %v932 = vsub.f32 %v788, %v894
  %v933 = vsub.f32 %v789, %v896
  %v934 = vsub.f32 %v790, %v898
  %v935 = vsub.f32 %v791, %v900
  %v936 = vsub.f32 %v792, %v902
  %v937 = vsub.f32 %v793, %v904
  %v938 = vsub.f32 %v794, %v906
  %940 = vset.pattern.permute.xlu0 0
  %941 = vperm.xlu0 %940, %v827
  %v942 = vpop.permute.xlu0 %941
  %945 = vset.pattern.permute.xlu0 0
  %946 = vperm.xlu0 %945, %v828
  %v947 = vpop.permute.xlu0 %946
  %950 = vset.pattern.permute.xlu0 0
  %951 = vperm.xlu0 %950, %v829
  %v952 = vpop.permute.xlu0 %951
  %955 = vset.pattern.permute.xlu0 0
  %956 = vperm.xlu0 %955, %v830
  %v957 = vpop.permute.xlu0 %956
  %960 = vset.pattern.permute.xlu0 0
  %961 = vperm.xlu0 %960, %v831
  %v962 = vpop.permute.xlu0 %961
  %965 = vset.pattern.permute.xlu0 0
  %966 = vperm.xlu0 %965, %v832
  %v967 = vpop.permute.xlu0 %966
  %970 = vset.pattern.permute.xlu0 0
  %971 = vperm.xlu0 %970, %v833
  %v972 = vpop.permute.xlu0 %971
  %975 = vset.pattern.permute.xlu0 0
  %976 = vperm.xlu0 %975, %v834
  %v977 = vpop.permute.xlu0 %976
  %980 = vset.pattern.permute.xlu0 0
  %981 = vperm.xlu0 %980, %v835
  %v982 = vpop.permute.xlu0 %981
  %985 = vset.pattern.permute.xlu0 0
  %986 = vperm.xlu0 %985, %v836
  %v987 = vpop.permute.xlu0 %986
  %990 = vset.pattern.permute.xlu0 0
  %991 = vperm.xlu0 %990, %v837
  %v992 = vpop.permute.xlu0 %991
  %995 = vset.pattern.permute.xlu0 0
  %996 = vperm.xlu0 %995, %v838
  %v997 = vpop.permute.xlu0 %996
  %1000 = vset.pattern.permute.xlu0 0
  %1001 = vperm.xlu0 %1000, %v839
  %v1002 = vpop.permute.xlu0 %1001
  %1005 = vset.pattern.permute.xlu0 0
  %1006 = vperm.xlu0 %1005, %v840
  %v1007 = vpop.permute.xlu0 %1006
  %1010 = vset.pattern.permute.xlu0 0
  %1011 = vperm.xlu0 %1010, %v841
  %v1012 = vpop.permute.xlu0 %1011
  %1015 = vset.pattern.permute.xlu0 0
  %1016 = vperm.xlu0 %1015, %v842
  %v1017 = vpop.permute.xlu0 %1016
  %v1019 = vmul.f32 %v460, %v942
  %v1020 = vmul.f32 %v462, %v942
  %v1021 = vmul.f32 %v466, %v947
  %v1022 = vmul.f32 %v468, %v947
  %v1023 = vmul.f32 %v472, %v952
  %v1024 = vmul.f32 %v474, %v952
  %v1025 = vmul.f32 %v478, %v957
  %v1026 = vmul.f32 %v480, %v957
  %v1027 = vmul.f32 %v484, %v962
  %v1028 = vmul.f32 %v486, %v962
  %v1029 = vmul.f32 %v490, %v967
  %v1030 = vmul.f32 %v492, %v967
  %v1031 = vmul.f32 %v496, %v972
  %v1032 = vmul.f32 %v498, %v972
  %v1033 = vmul.f32 %v502, %v977
  %v1034 = vmul.f32 %v504, %v977
  %v1035 = vmul.f32 %v508, %v982
  %v1036 = vmul.f32 %v510, %v982
  %v1037 = vmul.f32 %v514, %v987
  %v1038 = vmul.f32 %v516, %v987
  %v1039 = vmul.f32 %v520, %v992
  %v1040 = vmul.f32 %v522, %v992
  %v1041 = vmul.f32 %v526, %v997
  %v1042 = vmul.f32 %v528, %v997
  %v1043 = vmul.f32 %v532, %v1002
  %v1044 = vmul.f32 %v534, %v1002
  %v1045 = vmul.f32 %v538, %v1007
  %v1046 = vmul.f32 %v540, %v1007
  %v1047 = vmul.f32 %v544, %v1012
  %v1048 = vmul.f32 %v546, %v1012
  %v1049 = vmul.f32 %v550, %v1017
  %v1050 = vmul.f32 %v552, %v1017
  %1052 = vset.pattern.permute.xlu0 1
  %1053 = vperm.xlu0 %1052, %v923
  %v1054 = vpop.permute.xlu0 %1053
  %1057 = vset.pattern.permute.xlu0 1
  %1058 = vperm.xlu0 %1057, %v924
  %v1059 = vpop.permute.xlu0 %1058
  %1062 = vset.pattern.permute.xlu0 1
  %1063 = vperm.xlu0 %1062, %v925
  %v1064 = vpop.permute.xlu0 %1063
  %1067 = vset.pattern.permute.xlu0 1
  %1068 = vperm.xlu0 %1067, %v926
  %v1069 = vpop.permute.xlu0 %1068
  %1072 = vset.pattern.permute.xlu0 1
  %1073 = vperm.xlu0 %1072, %v927
  %v1074 = vpop.permute.xlu0 %1073
  %1077 = vset.pattern.permute.xlu0 1
  %1078 = vperm.xlu0 %1077, %v928
  %v1079 = vpop.permute.xlu0 %1078
  %1082 = vset.pattern.permute.xlu0 1
  %1083 = vperm.xlu0 %1082, %v929
  %v1084 = vpop.permute.xlu0 %1083
  %1087 = vset.pattern.permute.xlu0 1
  %1088 = vperm.xlu0 %1087, %v930
  %v1089 = vpop.permute.xlu0 %1088
  %1092 = vset.pattern.permute.xlu0 1
  %1093 = vperm.xlu0 %1092, %v931
  %v1094 = vpop.permute.xlu0 %1093
  %1097 = vset.pattern.permute.xlu0 1
  %1098 = vperm.xlu0 %1097, %v932
  %v1099 = vpop.permute.xlu0 %1098
  %1102 = vset.pattern.permute.xlu0 1
  %1103 = vperm.xlu0 %1102, %v933
  %v1104 = vpop.permute.xlu0 %1103
  %1107 = vset.pattern.permute.xlu0 1
  %1108 = vperm.xlu0 %1107, %v934
  %v1109 = vpop.permute.xlu0 %1108
  %1112 = vset.pattern.permute.xlu0 1
  %1113 = vperm.xlu0 %1112, %v935
  %v1114 = vpop.permute.xlu0 %1113
  %1117 = vset.pattern.permute.xlu0 1
  %1118 = vperm.xlu0 %1117, %v936
  %v1119 = vpop.permute.xlu0 %1118
  %1122 = vset.pattern.permute.xlu0 1
  %1123 = vperm.xlu0 %1122, %v937
  %v1124 = vpop.permute.xlu0 %1123
  %1127 = vset.pattern.permute.xlu0 1
  %1128 = vperm.xlu0 %1127, %v938
  %v1129 = vpop.permute.xlu0 %1128
  %v1131 = vadd.f32 %v1019, %v1054
  %v1132 = vadd.f32 %v1020, %v1054
  %v1133 = vadd.f32 %v1021, %v1059
  %v1134 = vadd.f32 %v1022, %v1059
  %v1135 = vadd.f32 %v1023, %v1064
  %v1136 = vadd.f32 %v1024, %v1064
  %v1137 = vadd.f32 %v1025, %v1069
  %v1138 = vadd.f32 %v1026, %v1069
  %v1139 = vadd.f32 %v1027, %v1074
  %v1140 = vadd.f32 %v1028, %v1074
  %v1141 = vadd.f32 %v1029, %v1079
  %v1142 = vadd.f32 %v1030, %v1079
  %v1143 = vadd.f32 %v1031, %v1084
  %v1144 = vadd.f32 %v1032, %v1084
  %v1145 = vadd.f32 %v1033, %v1089
  %v1146 = vadd.f32 %v1034, %v1089
  %v1147 = vadd.f32 %v1035, %v1094
  %v1148 = vadd.f32 %v1036, %v1094
  %v1149 = vadd.f32 %v1037, %v1099
  %v1150 = vadd.f32 %v1038, %v1099
  %v1151 = vadd.f32 %v1039, %v1104
  %v1152 = vadd.f32 %v1040, %v1104
  %v1153 = vadd.f32 %v1041, %v1109
  %v1154 = vadd.f32 %v1042, %v1109
  %v1155 = vadd.f32 %v1043, %v1114
  %v1156 = vadd.f32 %v1044, %v1114
  %v1157 = vadd.f32 %v1045, %v1119
  %v1158 = vadd.f32 %v1046, %v1119
  %v1159 = vadd.f32 %v1047, %v1124
  %v1160 = vadd.f32 %v1048, %v1124
  %v1161 = vadd.f32 %v1049, %v1129
  %v1162 = vadd.f32 %v1050, %v1129
  %1163 = vst [vmem:[%s4] sm:$0xff] %v1131
  %1164 = vst.msk [vmem:[%s4 + $0x8] sm:$0xff] %vm554, %v1132
  %1165 = vst [vmem:[%s4 + $0x10] sm:$0xff] %v1133
  %1166 = vst.msk [vmem:[%s4 + $0x18] sm:$0xff] %vm554, %v1134
  %1167 = vst [vmem:[%s4 + $0x20] sm:$0xff] %v1135
  %1168 = vst.msk [vmem:[%s4 + $0x28] sm:$0xff] %vm554, %v1136
  %1169 = vst [vmem:[%s4 + $0x30] sm:$0xff] %v1137
  %1170 = vst.msk [vmem:[%s4 + $0x38] sm:$0xff] %vm554, %v1138
  %1171 = vst [vmem:[%s4 + $0x40] sm:$0xff] %v1139
  %1172 = vst.msk [vmem:[%s4 + $0x48] sm:$0xff] %vm554, %v1140
  %1173 = vst [vmem:[%s4 + $0x50] sm:$0xff] %v1141
  %1174 = vst.msk [vmem:[%s4 + $0x58] sm:$0xff] %vm554, %v1142
  %1175 = vst [vmem:[%s4 + $0x60] sm:$0xff] %v1143
  %1176 = vst.msk [vmem:[%s4 + $0x68] sm:$0xff] %vm554, %v1144
  %1177 = vst [vmem:[%s4 + $0x70] sm:$0xff] %v1145
  %1178 = vst.msk [vmem:[%s4 + $0x78] sm:$0xff] %vm554, %v1146
  %1179 = vst [vmem:[%s4 + $0x80] sm:$0xff] %v1147
  %1180 = vst.msk [vmem:[%s4 + $0x88] sm:$0xff] %vm554, %v1148
  %1181 = vst [vmem:[%s4 + $0x90] sm:$0xff] %v1149
  %1182 = vst.msk [vmem:[%s4 + $0x98] sm:$0xff] %vm554, %v1150
  %1183 = vst [vmem:[%s4 + $0xa0] sm:$0xff] %v1151
  %1184 = vst.msk [vmem:[%s4 + $0xa8] sm:$0xff] %vm554, %v1152
  %1185 = vst [vmem:[%s4 + $0xb0] sm:$0xff] %v1153
  %1186 = vst.msk [vmem:[%s4 + $0xb8] sm:$0xff] %vm554, %v1154
  %1187 = vst [vmem:[%s4 + $0xc0] sm:$0xff] %v1155
  %1188 = vst.msk [vmem:[%s4 + $0xc8] sm:$0xff] %vm554, %v1156
  %1189 = vst [vmem:[%s4 + $0xd0] sm:$0xff] %v1157
  %1190 = vst.msk [vmem:[%s4 + $0xd8] sm:$0xff] %vm554, %v1158
  %1191 = vst [vmem:[%s4 + $0xe0] sm:$0xff] %v1159
  %1192 = vst.msk [vmem:[%s4 + $0xe8] sm:$0xff] %vm554, %v1160
  %1193 = vst [vmem:[%s4 + $0xf0] sm:$0xff] %v1161
  %1194 = vst.msk [vmem:[%s4 + $0xf8] sm:$0xff] %vm554, %v1162
  // Predicated region
  $region18: #{tpu_custom_call.1} parent=0 // pred_check
    _
  $region19: #{tpu_custom_call.1} parent=0 // pred_check_branch
    %1196 = sbr.rel (0) target = $region21
  $region20: #{tpu_custom_call.1} parent=0 // pred_region
    _
  $region21: #{tpu_custom_call.1} parent=0 // pred_fallthru
    _
  // Predicated region
  $region22: #{tpu_custom_call.1} parent=0 // pred_check
    _
  $region23: #{tpu_custom_call.1} parent=0 // pred_check_branch
    %1198 = sbr.rel (0) target = $region25
  $region24: #{tpu_custom_call.1} parent=0 // pred_region
    _
  $region25: #{tpu_custom_call.1} parent=0 // pred_fallthru
    _

</llo_original>
